<compile_context>
chip_gen: v7x
topology: tpu7x:2x2x1
jax: 0.10.0
libtpu: 0.0.40
codegen_flags: <defaults>
</compile_context>

<pallas_src>
import math

import jax
import jax.numpy as jnp
from jax.experimental import pallas as pl
from jax.experimental.pallas import tpu as pltpu  # noqa: F401  (not needed at this size)

N_HEADS = 2          # MultiHeadAttention(embed_dim, 2) inside TransformerLayer
LN_EPS = 1e-5
LANE = 128           # TPU lane width; parameter / output slabs are lane-padded to this


# ----------------------------------------------------------------------------
# Packed-parameter slab layout (all offsets are 8-aligned sublane rows)
# ----------------------------------------------------------------------------
def _round_up(x, m=8):
    return ((x + m - 1) // m) * m


def _row_offsets(embed_dim, d_internal):
    offs, r = {}, 0
    for name, rows in (("wq", embed_dim), ("wk", embed_dim), ("wv", embed_dim),
                       ("wo", embed_dim), ("ff1", embed_dim), ("ff2", d_internal),
                       ("vec", 8), ("msk", 8)):
        offs[name] = r
        r += _round_up(rows)
    offs["total"] = r
    return offs


# ----------------------------------------------------------------------------
# Fused TransformerLayer kernel (built per static shape)
# ----------------------------------------------------------------------------
def _make_kernel(seq_len, embed_dim, d_internal):
    S, E, Dint, H = seq_len, embed_dim, d_internal, N_HEADS
    offs = _row_offsets(E, Dint)
    o_wq, o_wk, o_wv, o_wo = offs["wq"], offs["wk"], offs["wv"], offs["wo"]
    o_f1, o_f2, o_vec, o_msk = offs["ff1"], offs["ff2"], offs["vec"], offs["msk"]

    def layernorm(x, g, b):
        mu = jnp.mean(x, axis=-1, keepdims=True)
        var = jnp.mean((x - mu) * (x - mu), axis=-1, keepdims=True)
        return (x - mu) * jax.lax.rsqrt(var + LN_EPS) * g + b

    def kernel(x_ref, p_ref, out_ref):
        # x_ref  : [3S, E]   rows 0:S query | S:2S key | 2S:3S value
        # p_ref  : [R, 128]  packed parameter slab (see pack_layer_params)
        # out_ref: [2S, 128] rows 0:S norm2_out | S:2S attention_out (lanes >= E are 0)
        query = x_ref[0:S, :]
        key = x_ref[S:2 * S, :]
        value = x_ref[2 * S:3 * S, :]

        # ---- parameter slices: all sublane-aligned, all start at lane 0 -------------
        wq = p_ref[o_wq:o_wq + E, 0:E]        # block-diag Wq^T (1/sqrt(Dh) folded in)
        wk = p_ref[o_wk:o_wk + E, 0:E]        # block-diag Wk^T
        wv = p_ref[o_wv:o_wv + E, 0:E]        # block-diag Wv^T
        wo = p_ref[o_wo:o_wo + E, 0:E]        # Wo^T
        w1 = p_ref[o_f1:o_f1 + E, 0:Dint]     # FF W1^T
        w2 = p_ref[o_f2:o_f2 + Dint, 0:E]     # FF W2^T

        bo = p_ref[o_vec + 0:o_vec + 1, 0:E]
        ln1_g = p_ref[o_vec + 1:o_vec + 2, 0:E]
        ln1_b = p_ref[o_vec + 2:o_vec + 3, 0:E]
        ln2_g = p_ref[o_vec + 3:o_vec + 4, 0:E]
        ln2_b = p_ref[o_vec + 4:o_vec + 5, 0:E]
        ff_b1 = p_ref[o_vec + 5:o_vec + 6, 0:Dint]
        ff_b2 = p_ref[o_vec + 6:o_vec + 7, 0:E]

        # ---- Q/K/V projections: block-diag weights keep E on lanes -------------------
        q = jnp.dot(query, wq, preferred_element_type=jnp.float32)   # [S,E], pre-scaled
        k = jnp.dot(key, wk, preferred_element_type=jnp.float32)
        v = jnp.dot(value, wv, preferred_element_type=jnp.float32)

        # ---- per-head attention via head-lane masks (no 16-lane slices, no .T) -------
        dn = (((1,), (1,)), ((), ()))   # contract last dim of both operands: q @ k^T
        ctx = jnp.zeros((S, E), jnp.float32)
        for h in range(H):                                      # static 2-way unroll
            m = p_ref[o_msk + h:o_msk + h + 1, 0:E]             # [1,E] head-h lane mask
            kh = k * m
            vh = v * m
            s = jax.lax.dot_general(q, kh, dn,
                                    preferred_element_type=jnp.float32)      # [S,S]
            s = s - jnp.max(s, axis=-1, keepdims=True)
            p = jnp.exp(s)
            p = p / jnp.sum(p, axis=-1, keepdims=True)          # exact normalization
            ctx = ctx + jnp.dot(p, vh, preferred_element_type=jnp.float32)   # head lanes

        attn = jnp.dot(ctx, wo, preferred_element_type=jnp.float32) + bo     # [S,E]

        # ---- residual + LayerNorm1 (dropout = identity under inference semantics) ----
        # TODO(synk): training-mode nn.Dropout(0.2) (stochastic masking) not implemented.
        norm1 = layernorm(attn + value, ln1_g, ln1_b)

        # ---- feed-forward: Linear -> ReLU -> Linear -----------------------------------
        h1 = jnp.maximum(jnp.dot(norm1, w1, preferred_element_type=jnp.float32) + ff_b1,
                         0.0)
        ff = jnp.dot(h1, w2, preferred_element_type=jnp.float32) + ff_b2

        # ---- residual + LayerNorm2 ------------------------------------------------------
        norm2 = layernorm(ff + norm1, ln2_g, ln2_b)

        # ---- single lane-dense [2S,128] output slab (one output DMA, dense writeback) --
        out_ref[...] = jnp.zeros((2 * S, LANE), jnp.float32)
        out_ref[0:S, 0:E] = norm2
        out_ref[S:2 * S, 0:E] = attn

    return kernel


# ----------------------------------------------------------------------------
# Wrapper: no grid, no BlockSpec pipelining — 2 input DMAs, 1 output DMA
# ----------------------------------------------------------------------------
def _forward(key, query, value, param_slab, *, d_internal):
    squeeze = key.ndim == 3
    if squeeze:
        assert key.shape[0] == 1, \
            "batch=1 (as used by the a3 Transformer); fold batch into rows for B>1"
        key, query, value = key[0], query[0], value[0]
    S, E = value.shape

    x = jnp.concatenate([query, key, value], axis=0)          # [3S, E] sublane-stacked
    out = pl.pallas_call(
        _make_kernel(S, E, d_internal),
        out_shape=jax.ShapeDtypeStruct((2 * S, LANE), jnp.float32),
    )(x, param_slab)

    norm2_out = out[0:S, 0:E]
    attention_out = out[S:2 * S, 0:E]
    if squeeze:
        norm2_out, attention_out = norm2_out[None], attention_out[None]
    return norm2_out, attention_out


transformer_layer_forward = jax.jit(_forward, static_argnames=("d_internal",))


# ----------------------------------------------------------------------------
# Deterministic parameter init (mirrors the PyTorch module) + packing
# ----------------------------------------------------------------------------
def _init_linear(rng, in_dim, out_dim, bias=True):
    k1, k2 = jax.random.split(rng)
    bound = 1.0 / math.sqrt(in_dim)
    W = jax.random.uniform(k1, (out_dim, in_dim), jnp.float32, -bound, bound)
    b = jax.random.uniform(k2, (out_dim,), jnp.float32, -bound, bound) if bias else None
    return W, b


def init_raw_params(rng, embed_dim, d_internal):
    Dh = embed_dim // N_HEADS
    ks = jax.random.split(rng, 6)
    wq, _ = _init_linear(ks[0], Dh, Dh, bias=False)
    wk, _ = _init_linear(ks[1], Dh, Dh, bias=False)
    wv, _ = _init_linear(ks[2], Dh, Dh, bias=False)
    wo, bo = _init_linear(ks[3], embed_dim, embed_dim)
    fw1, fb1 = _init_linear(ks[4], embed_dim, d_internal)
    fw2, fb2 = _init_linear(ks[5], d_internal, embed_dim)
    return {
        "wq": wq, "wk": wk, "wv": wv, "wo": wo, "bo": bo,
        "ln1_g": jnp.ones((embed_dim,), jnp.float32),
        "ln1_b": jnp.zeros((embed_dim,), jnp.float32),
        "fw1": fw1, "fb1": fb1, "fw2": fw2, "fb2": fb2,
        "ln2_g": jnp.ones((embed_dim,), jnp.float32),
        "ln2_b": jnp.zeros((embed_dim,), jnp.float32),
    }


def _block_diag_heads(w, n_heads):
    """Tile a per-head [Dh,Dh] RHS into a block-diagonal [E,E] RHS (shared across heads)."""
    Dh = w.shape[0]
    E = Dh * n_heads
    out = jnp.zeros((E, E), w.dtype)
    for h in range(n_heads):
        out = out.at[h * Dh:(h + 1) * Dh, h * Dh:(h + 1) * Dh].set(w)
    return out


def pack_layer_params(raw):
    """Pack the 13 torch parameters into one [R,128] f32 slab (single DMA, aligned reads)."""
    E = raw["wo"].shape[0]
    Dh = raw["wq"].shape[0]
    Dint = raw["fw1"].shape[0]
    H = E // Dh
    assert H == N_HEADS
    offs = _row_offsets(E, Dint)
    scale = 1.0 / math.sqrt(Dh)   # folded into the Wq block

    def pad_block(x, rows):
        r, c = x.shape
        return jnp.pad(x, ((0, rows - r), (0, LANE - c)))

    vec = jnp.zeros((8, LANE), jnp.float32)
    vec = vec.at[0, :E].set(raw["bo"])
    vec = vec.at[1, :E].set(raw["ln1_g"])
    vec = vec.at[2, :E].set(raw["ln1_b"])
    vec = vec.at[3, :E].set(raw["ln2_g"])
    vec = vec.at[4, :E].set(raw["ln2_b"])
    vec = vec.at[5, :Dint].set(raw["fb1"])
    vec = vec.at[6, :E].set(raw["fb2"])

    msk = jnp.zeros((8, LANE), jnp.float32)
    for h in range(H):
        msk = msk.at[h, h * Dh:(h + 1) * Dh].set(1.0)        # head-h lane mask

    slab = jnp.concatenate([
        pad_block(_block_diag_heads(raw["wq"].T, H) * scale, _round_up(E)),
        pad_block(_block_diag_heads(raw["wk"].T, H), _round_up(E)),
        pad_block(_block_diag_heads(raw["wv"].T, H), _round_up(E)),
        pad_block(raw["wo"].T, _round_up(E)),
        pad_block(raw["fw1"].T, _round_up(E)),
        pad_block(raw["fw2"].T, _round_up(Dint)),
        vec, msk,
    ], axis=0)
    assert slab.shape == (offs["total"], LANE)
    return slab


# ----------------------------------------------------------------------------
# Pure-JAX reference (same math as the PyTorch module, for a numerical check)
# ----------------------------------------------------------------------------
def _reference_layer(key2d, query2d, value2d, raw):
    S, E = value2d.shape
    Dh = E // N_HEADS
    q = (query2d.reshape(S, N_HEADS, Dh) @ raw["wq"].T).transpose(1, 0, 2)   # [H,S,Dh]
    k = (key2d.reshape(S, N_HEADS, Dh) @ raw["wk"].T).transpose(1, 0, 2)
    v = (value2d.reshape(S, N_HEADS, Dh) @ raw["wv"].T).transpose(1, 0, 2)
    prod = jnp.einsum('hqd,hkd->hqk', q, k) / math.sqrt(Dh)
    scores = jax.nn.softmax(prod, axis=-1)
    ctx = jnp.einsum('hqk,hkd->hqd', scores, v)
    concat = ctx.transpose(1, 0, 2).reshape(S, E)
    attn_out = concat @ raw["wo"].T + raw["bo"]

    def ln(x, g, b):
        mu = x.mean(-1, keepdims=True)
        var = ((x - mu) ** 2).mean(-1, keepdims=True)
        return (x - mu) / jnp.sqrt(var + LN_EPS) * g + b

    norm1 = ln(attn_out + value2d, raw["ln1_g"], raw["ln1_b"])
    ff = jnp.maximum(norm1 @ raw["fw1"].T + raw["fb1"], 0.0) @ raw["fw2"].T + raw["fb2"]
    norm2 = ln(ff + norm1, raw["ln2_g"], raw["ln2_b"])
    return norm2, attn_out


# ----------------------------------------------------------------------------
if __name__ == "__main__":
    EMBED_DIM, D_INTERNAL, SEQ_LEN, BATCH = 32, 64, 8, 1

    root = jax.random.PRNGKey(0)
    k_params, k_key, k_query, k_value = jax.random.split(root, 4)
    raw = init_raw_params(k_params, EMBED_DIM, D_INTERNAL)
    param_slab = pack_layer_params(raw)

    key_in = jax.random.normal(k_key, (BATCH, SEQ_LEN, EMBED_DIM), jnp.float32)
    query_in = jax.random.normal(k_query, (BATCH, SEQ_LEN, EMBED_DIM), jnp.float32)
    value_in = jax.random.normal(k_value, (BATCH, SEQ_LEN, EMBED_DIM), jnp.float32)

    norm2_out, attention_out = transformer_layer_forward(
        key_in, query_in, value_in, param_slab, d_internal=D_INTERNAL)
    jax.block_until_ready((norm2_out, attention_out))

    # numerical sanity check against a pure-JAX reference of the same math
    ref_norm2, ref_attn = _reference_layer(key_in[0], query_in[0], value_in[0], raw)
    assert norm2_out.shape == (BATCH, SEQ_LEN, EMBED_DIM)
    assert attention_out.shape == (BATCH, SEQ_LEN, EMBED_DIM)
    assert jnp.allclose(norm2_out[0], ref_norm2, rtol=1e-3, atol=1e-3)
    assert jnp.allclose(attention_out[0], ref_attn, rtol=1e-3, atol=1e-3)

    print("KERNEL_OK")
</pallas_src>

<mosaic_0001>
module attributes {stable_mosaic.version = 11 : i64} {
  func.func @kernel(%arg0: memref<24x32xf32, #tpu.memory_space<vmem>>, %arg1: memref<240x128xf32, #tpu.memory_space<vmem>>, %arg2: memref<16x128xf32, #tpu.memory_space<vmem>>) attributes {dimension_semantics = [], scalar_prefetch = 0 : i64, scratch_operands = 0 : i64, tpu.core_type = #tpu.core_type<tc>} {
    %c0 = arith.constant 0 : index
    %c0_0 = arith.constant 0 : index
    %0 = vector.load %arg0[%c0, %c0_0] : memref<24x32xf32, #tpu.memory_space<vmem>>, vector<8x32xf32>
    %c8 = arith.constant 8 : index
    %c0_1 = arith.constant 0 : index
    %1 = vector.load %arg0[%c8, %c0_1] : memref<24x32xf32, #tpu.memory_space<vmem>>, vector<8x32xf32>
    %c16 = arith.constant 16 : index
    %c0_2 = arith.constant 0 : index
    %2 = vector.load %arg0[%c16, %c0_2] : memref<24x32xf32, #tpu.memory_space<vmem>>, vector<8x32xf32>
    %c0_3 = arith.constant 0 : index
    %c0_4 = arith.constant 0 : index
    %3 = vector.load %arg1[%c0_3, %c0_4] : memref<240x128xf32, #tpu.memory_space<vmem>>, vector<32x32xf32>
    %c32 = arith.constant 32 : index
    %c0_5 = arith.constant 0 : index
    %4 = vector.load %arg1[%c32, %c0_5] : memref<240x128xf32, #tpu.memory_space<vmem>>, vector<32x32xf32>
    %c64 = arith.constant 64 : index
    %c0_6 = arith.constant 0 : index
    %5 = vector.load %arg1[%c64, %c0_6] : memref<240x128xf32, #tpu.memory_space<vmem>>, vector<32x32xf32>
    %c96 = arith.constant 96 : index
    %c0_7 = arith.constant 0 : index
    %6 = vector.load %arg1[%c96, %c0_7] : memref<240x128xf32, #tpu.memory_space<vmem>>, vector<32x32xf32>
    %c128 = arith.constant 128 : index
    %c0_8 = arith.constant 0 : index
    %7 = vector.load %arg1[%c128, %c0_8] : memref<240x128xf32, #tpu.memory_space<vmem>>, vector<32x64xf32>
    %c160 = arith.constant 160 : index
    %c0_9 = arith.constant 0 : index
    %8 = vector.load %arg1[%c160, %c0_9] : memref<240x128xf32, #tpu.memory_space<vmem>>, vector<64x32xf32>
    %c224 = arith.constant 224 : index
    %c0_10 = arith.constant 0 : index
    %9 = vector.load %arg1[%c224, %c0_10] : memref<240x128xf32, #tpu.memory_space<vmem>>, vector<1x32xf32>
    %c225 = arith.constant 225 : index
    %c0_11 = arith.constant 0 : index
    %10 = vector.load %arg1[%c225, %c0_11] : memref<240x128xf32, #tpu.memory_space<vmem>>, vector<1x32xf32>
    %c226 = arith.constant 226 : index
    %c0_12 = arith.constant 0 : index
    %11 = vector.load %arg1[%c226, %c0_12] : memref<240x128xf32, #tpu.memory_space<vmem>>, vector<1x32xf32>
    %c227 = arith.constant 227 : index
    %c0_13 = arith.constant 0 : index
    %12 = vector.load %arg1[%c227, %c0_13] : memref<240x128xf32, #tpu.memory_space<vmem>>, vector<1x32xf32>
    %c228 = arith.constant 228 : index
    %c0_14 = arith.constant 0 : index
    %13 = vector.load %arg1[%c228, %c0_14] : memref<240x128xf32, #tpu.memory_space<vmem>>, vector<1x32xf32>
    %c229 = arith.constant 229 : index
    %c0_15 = arith.constant 0 : index
    %14 = vector.load %arg1[%c229, %c0_15] : memref<240x128xf32, #tpu.memory_space<vmem>>, vector<1x64xf32>
    %c230 = arith.constant 230 : index
    %c0_16 = arith.constant 0 : index
    %15 = vector.load %arg1[%c230, %c0_16] : memref<240x128xf32, #tpu.memory_space<vmem>>, vector<1x32xf32>
    %cst = arith.constant dense<0.000000e+00> : vector<8x32xf32>
    %16 = tpu.matmul %0, %3, %cst {dimension_numbers = #tpu.dot_dimension_numbers<[1], [0], [0], [1], [0, 0, 1, 1], [], []>} : vector<8x32xf32>, vector<32x32xf32>, vector<8x32xf32> -> vector<8x32xf32>
    %cst_17 = arith.constant dense<0.000000e+00> : vector<8x32xf32>
    %17 = tpu.matmul %1, %4, %cst_17 {dimension_numbers = #tpu.dot_dimension_numbers<[1], [0], [0], [1], [0, 0, 1, 1], [], []>} : vector<8x32xf32>, vector<32x32xf32>, vector<8x32xf32> -> vector<8x32xf32>
    %cst_18 = arith.constant dense<0.000000e+00> : vector<8x32xf32>
    %18 = tpu.matmul %2, %5, %cst_18 {dimension_numbers = #tpu.dot_dimension_numbers<[1], [0], [0], [1], [0, 0, 1, 1], [], []>} : vector<8x32xf32>, vector<32x32xf32>, vector<8x32xf32> -> vector<8x32xf32>
    %cst_19 = arith.constant 0.000000e+00 : f32
    %19 = vector.broadcast %cst_19 : f32 to vector<8x32xf32>
    %c232 = arith.constant 232 : index
    %c0_20 = arith.constant 0 : index
    %20 = vector.load %arg1[%c232, %c0_20] : memref<240x128xf32, #tpu.memory_space<vmem>>, vector<1x32xf32>
    %21 = vector.broadcast %20 : vector<1x32xf32> to vector<8x32xf32>
    %22 = arith.mulf %17, %21 : vector<8x32xf32>
    %23 = vector.broadcast %20 : vector<1x32xf32> to vector<8x32xf32>
    %24 = arith.mulf %18, %23 : vector<8x32xf32>
    %cst_21 = arith.constant dense<0.000000e+00> : vector<8x8xf32>
    %25 = tpu.matmul %16, %22, %cst_21 {dimension_numbers = #tpu.dot_dimension_numbers<[1], [1], [0], [0], [0, 0, 1, 0], [], []>} : vector<8x32xf32>, vector<8x32xf32>, vector<8x8xf32> -> vector<8x8xf32>
    %cst_22 = arith.constant dense<0xFF800000> : vector<8xf32>
    %26 = vector.multi_reduction <maximumf>, %25, %cst_22 [1] : vector<8x8xf32> to vector<8xf32>
    %27 = vector.shape_cast %26 : vector<8xf32> to vector<8x1xf32>
    %28 = vector.broadcast %27 : vector<8x1xf32> to vector<8x8xf32>
    %29 = arith.subf %25, %28 : vector<8x8xf32>
    %30 = math.exp %29 : vector<8x8xf32>
    %cst_23 = arith.constant dense<0.000000e+00> : vector<8xf32>
    %31 = vector.multi_reduction <add>, %30, %cst_23 [1] : vector<8x8xf32> to vector<8xf32>
    %32 = vector.shape_cast %31 : vector<8xf32> to vector<8x1xf32>
    %33 = vector.broadcast %32 : vector<8x1xf32> to vector<8x8xf32>
    %34 = arith.divf %30, %33 : vector<8x8xf32>
    %cst_24 = arith.constant dense<0.000000e+00> : vector<8x32xf32>
    %35 = tpu.matmul %34, %24, %cst_24 {dimension_numbers = #tpu.dot_dimension_numbers<[1], [0], [0], [1], [0, 0, 1, 1], [], []>} : vector<8x8xf32>, vector<8x32xf32>, vector<8x32xf32> -> vector<8x32xf32>
    %36 = arith.addf %19, %35 : vector<8x32xf32>
    %c233 = arith.constant 233 : index
    %c0_25 = arith.constant 0 : index
    %37 = vector.load %arg1[%c233, %c0_25] : memref<240x128xf32, #tpu.memory_space<vmem>>, vector<1x32xf32>
    %38 = vector.broadcast %37 : vector<1x32xf32> to vector<8x32xf32>
    %39 = arith.mulf %17, %38 : vector<8x32xf32>
    %40 = vector.broadcast %37 : vector<1x32xf32> to vector<8x32xf32>
    %41 = arith.mulf %18, %40 : vector<8x32xf32>
    %cst_26 = arith.constant dense<0.000000e+00> : vector<8x8xf32>
    %42 = tpu.matmul %16, %39, %cst_26 {dimension_numbers = #tpu.dot_dimension_numbers<[1], [1], [0], [0], [0, 0, 1, 0], [], []>} : vector<8x32xf32>, vector<8x32xf32>, vector<8x8xf32> -> vector<8x8xf32>
    %cst_27 = arith.constant dense<0xFF800000> : vector<8xf32>
    %43 = vector.multi_reduction <maximumf>, %42, %cst_27 [1] : vector<8x8xf32> to vector<8xf32>
    %44 = vector.shape_cast %43 : vector<8xf32> to vector<8x1xf32>
    %45 = vector.broadcast %44 : vector<8x1xf32> to vector<8x8xf32>
    %46 = arith.subf %42, %45 : vector<8x8xf32>
    %47 = math.exp %46 : vector<8x8xf32>
    %cst_28 = arith.constant dense<0.000000e+00> : vector<8xf32>
    %48 = vector.multi_reduction <add>, %47, %cst_28 [1] : vector<8x8xf32> to vector<8xf32>
    %49 = vector.shape_cast %48 : vector<8xf32> to vector<8x1xf32>
    %50 = vector.broadcast %49 : vector<8x1xf32> to vector<8x8xf32>
    %51 = arith.divf %47, %50 : vector<8x8xf32>
    %cst_29 = arith.constant dense<0.000000e+00> : vector<8x32xf32>
    %52 = tpu.matmul %51, %41, %cst_29 {dimension_numbers = #tpu.dot_dimension_numbers<[1], [0], [0], [1], [0, 0, 1, 1], [], []>} : vector<8x8xf32>, vector<8x32xf32>, vector<8x32xf32> -> vector<8x32xf32>
    %53 = arith.addf %36, %52 : vector<8x32xf32>
    %cst_30 = arith.constant dense<0.000000e+00> : vector<8x32xf32>
    %54 = tpu.matmul %53, %6, %cst_30 {dimension_numbers = #tpu.dot_dimension_numbers<[1], [0], [0], [1], [0, 0, 1, 1], [], []>} : vector<8x32xf32>, vector<32x32xf32>, vector<8x32xf32> -> vector<8x32xf32>
    %55 = vector.broadcast %9 : vector<1x32xf32> to vector<8x32xf32>
    %56 = arith.addf %54, %55 : vector<8x32xf32>
    %57 = arith.addf %56, %2 : vector<8x32xf32>
    %cst_31 = arith.constant dense<0.000000e+00> : vector<8xf32>
    %58 = vector.multi_reduction <add>, %57, %cst_31 [1] : vector<8x32xf32> to vector<8xf32>
    %59 = vector.shape_cast %58 : vector<8xf32> to vector<8x1xf32>
    %cst_32 = arith.constant 3.200000e+01 : f32
    %60 = vector.broadcast %cst_32 : f32 to vector<8x1xf32>
    %61 = arith.divf %59, %60 : vector<8x1xf32>
    %62 = vector.broadcast %61 : vector<8x1xf32> to vector<8x32xf32>
    %63 = arith.subf %57, %62 : vector<8x32xf32>
    %64 = vector.broadcast %61 : vector<8x1xf32> to vector<8x32xf32>
    %65 = arith.subf %57, %64 : vector<8x32xf32>
    %66 = arith.mulf %63, %65 : vector<8x32xf32>
    %cst_33 = arith.constant dense<0.000000e+00> : vector<8xf32>
    %67 = vector.multi_reduction <add>, %66, %cst_33 [1] : vector<8x32xf32> to vector<8xf32>
    %68 = vector.shape_cast %67 : vector<8xf32> to vector<8x1xf32>
    %cst_34 = arith.constant 3.200000e+01 : f32
    %69 = vector.broadcast %cst_34 : f32 to vector<8x1xf32>
    %70 = arith.divf %68, %69 : vector<8x1xf32>
    %71 = vector.broadcast %61 : vector<8x1xf32> to vector<8x32xf32>
    %72 = arith.subf %57, %71 : vector<8x32xf32>
    %cst_35 = arith.constant 9.99999974E-6 : f32
    %73 = vector.broadcast %cst_35 : f32 to vector<8x1xf32>
    %74 = arith.addf %70, %73 : vector<8x1xf32>
    %75 = math.rsqrt %74 : vector<8x1xf32>
    %76 = vector.broadcast %75 : vector<8x1xf32> to vector<8x32xf32>
    %77 = arith.mulf %72, %76 : vector<8x32xf32>
    %78 = vector.broadcast %10 : vector<1x32xf32> to vector<8x32xf32>
    %79 = arith.mulf %77, %78 : vector<8x32xf32>
    %80 = vector.broadcast %11 : vector<1x32xf32> to vector<8x32xf32>
    %81 = arith.addf %79, %80 : vector<8x32xf32>
    %cst_36 = arith.constant dense<0.000000e+00> : vector<8x64xf32>
    %82 = tpu.matmul %81, %7, %cst_36 {dimension_numbers = #tpu.dot_dimension_numbers<[1], [0], [0], [1], [0, 0, 1, 1], [], []>} : vector<8x32xf32>, vector<32x64xf32>, vector<8x64xf32> -> vector<8x64xf32>
    %83 = vector.broadcast %14 : vector<1x64xf32> to vector<8x64xf32>
    %84 = arith.addf %82, %83 : vector<8x64xf32>
    %cst_37 = arith.constant 0.000000e+00 : f32
    %85 = vector.broadcast %cst_37 : f32 to vector<8x64xf32>
    %86 = arith.maximumf %84, %85 : vector<8x64xf32>
    %cst_38 = arith.constant dense<0.000000e+00> : vector<8x32xf32>
    %87 = tpu.matmul %86, %8, %cst_38 {dimension_numbers = #tpu.dot_dimension_numbers<[1], [0], [0], [1], [0, 0, 1, 1], [], []>} : vector<8x64xf32>, vector<64x32xf32>, vector<8x32xf32> -> vector<8x32xf32>
    %88 = vector.broadcast %15 : vector<1x32xf32> to vector<8x32xf32>
    %89 = arith.addf %87, %88 : vector<8x32xf32>
    %90 = arith.addf %89, %81 : vector<8x32xf32>
    %cst_39 = arith.constant dense<0.000000e+00> : vector<8xf32>
    %91 = vector.multi_reduction <add>, %90, %cst_39 [1] : vector<8x32xf32> to vector<8xf32>
    %92 = vector.shape_cast %91 : vector<8xf32> to vector<8x1xf32>
    %cst_40 = arith.constant 3.200000e+01 : f32
    %93 = vector.broadcast %cst_40 : f32 to vector<8x1xf32>
    %94 = arith.divf %92, %93 : vector<8x1xf32>
    %95 = vector.broadcast %94 : vector<8x1xf32> to vector<8x32xf32>
    %96 = arith.subf %90, %95 : vector<8x32xf32>
    %97 = vector.broadcast %94 : vector<8x1xf32> to vector<8x32xf32>
    %98 = arith.subf %90, %97 : vector<8x32xf32>
    %99 = arith.mulf %96, %98 : vector<8x32xf32>
    %cst_41 = arith.constant dense<0.000000e+00> : vector<8xf32>
    %100 = vector.multi_reduction <add>, %99, %cst_41 [1] : vector<8x32xf32> to vector<8xf32>
    %101 = vector.shape_cast %100 : vector<8xf32> to vector<8x1xf32>
    %cst_42 = arith.constant 3.200000e+01 : f32
    %102 = vector.broadcast %cst_42 : f32 to vector<8x1xf32>
    %103 = arith.divf %101, %102 : vector<8x1xf32>
    %104 = vector.broadcast %94 : vector<8x1xf32> to vector<8x32xf32>
    %105 = arith.subf %90, %104 : vector<8x32xf32>
    %cst_43 = arith.constant 9.99999974E-6 : f32
    %106 = vector.broadcast %cst_43 : f32 to vector<8x1xf32>
    %107 = arith.addf %103, %106 : vector<8x1xf32>
    %108 = math.rsqrt %107 : vector<8x1xf32>
    %109 = vector.broadcast %108 : vector<8x1xf32> to vector<8x32xf32>
    %110 = arith.mulf %105, %109 : vector<8x32xf32>
    %111 = vector.broadcast %12 : vector<1x32xf32> to vector<8x32xf32>
    %112 = arith.mulf %110, %111 : vector<8x32xf32>
    %113 = vector.broadcast %13 : vector<1x32xf32> to vector<8x32xf32>
    %114 = arith.addf %112, %113 : vector<8x32xf32>
    %cst_44 = arith.constant 0.000000e+00 : f32
    %115 = vector.broadcast %cst_44 : f32 to vector<16x128xf32>
    %c0_45 = arith.constant 0 : index
    %c0_46 = arith.constant 0 : index
    %116 = vector.load %arg2[%c0_45, %c0_46] : memref<16x128xf32, #tpu.memory_space<vmem>>, vector<16x128xf32>
    tpu.vector_store %arg2[%c0_45, %c0_46], %115 {strides = array<i32>} : memref<16x128xf32, #tpu.memory_space<vmem>>, vector<16x128xf32>,
    %c0_47 = arith.constant 0 : index
    %c0_48 = arith.constant 0 : index
    %117 = vector.load %arg2[%c0_47, %c0_48] : memref<16x128xf32, #tpu.memory_space<vmem>>, vector<8x32xf32>
    tpu.vector_store %arg2[%c0_47, %c0_48], %114 {strides = array<i32>} : memref<16x128xf32, #tpu.memory_space<vmem>>, vector<8x32xf32>,
    %c8_49 = arith.constant 8 : index
    %c0_50 = arith.constant 0 : index
    %118 = vector.load %arg2[%c8_49, %c0_50] : memref<16x128xf32, #tpu.memory_space<vmem>>, vector<8x32xf32>
    tpu.vector_store %arg2[%c8_49, %c0_50], %56 {strides = array<i32>} : memref<16x128xf32, #tpu.memory_space<vmem>>, vector<8x32xf32>,
    return
  }
}

</mosaic_0001>

<llo_original>
// kernel: _forward.1
$region0: #{_forward.1}
  #allocation0 [shape = 'u32[]', space=smem, size = 0x4, offset = 0x4, fixed_abs, tag = 'smem constant byte address 0x4 - core index']
  #allocation1 [shape = 'u32[144,128]{1,0:T(1,128)}', space=vmem, size = 0x12000, scoped, tag = 'internal scratch']
  %s0 = inlined_call_operand.vmem [shape: f32[24,32], index: 0, kind: input, shape index: {}]
  %s1 = inlined_call_operand.hbm [shape: f32[240,128], index: 1, kind: input, shape index: {}]
  %s2 = inlined_call_operand.vmem [shape: f32[16,128], index: 2, kind: output, shape index: {}]
  %s3 = sld [smem:[#allocation0]]
  $region22: #{_forward.1} parent=0
    _
  %s5 = ssub.s32 1, %s3
  %s6 = scalar_select 0, %s5, %s3
  $region1: #{_forward.1} parent=0
    #allocation2 [shape = 'u8[122880]{0}', space=vmem, size = 0x1e000, scoped, tag = 'input window, operand 1, single buffered']
    #allocation3 [shape = 's32[1]{0}', space=sflag, size = 0x4, scoped, tag = 'scoped memory for _forward.1']
    %7 = vsyncpa [#allocation3], 0
    // Predicated region
    $region2: #{_forward.1} parent=1 // pred_check
      _
    $region3: #{_forward.1} parent=1 // pred_check_branch
      %9 = sbr.rel (0) target = $region5
    $region4: #{_forward.1} parent=1 // pred_region
      _
    $region5: #{_forward.1} parent=1 // pred_fallthru
      _
    // Predicated region
    $region6: #{_forward.1} parent=1 // pred_check
      _
    $region7: #{_forward.1} parent=1 // pred_check_branch
      %11 = sbr.rel (0) target = $region9
    $region8: #{_forward.1} parent=1 // pred_region
      %s13 = ssub.s32 3840, 3840
      %14 = vsyncadd [#allocation3], %s13
      %s15 = sshll.u32 [#allocation2], 4
      %s16 = int_to_ptr.vmem [resolvable:$true] %s15
      %21 = dma.hbm_to_vmem [thread:$0]  %s1, 3840, %s16, [#allocation3], 128, 128, 8
    $region9: #{_forward.1} parent=1 // pred_fallthru
      _
    // Predicated region
    $region10: #{_forward.1} parent=1 // pred_check
      _
    $region11: #{_forward.1} parent=1 // pred_check_branch
      %23 = sbr.rel (0) target = $region13
    $region12: #{_forward.1} parent=1 // pred_region
      %24 = dma.done [#allocation3], 3840
    $region13: #{_forward.1} parent=1 // pred_fallthru
      _
    %v25 = vld [vmem:[%s0] sm:$0xff]
    %v26 = vld [vmem:[%s0 + $0x8] sm:$0xff]
    %v27 = vld [vmem:[%s0 + $0x10] sm:$0xff]
    %v28 = vld [vmem:[#allocation2] sm:$0xff]
    %v29 = vld [vmem:[#allocation2 + $0x8] sm:$0xff]
    %v30 = vld [vmem:[#allocation2 + $0x10] sm:$0xff]
    %v31 = vld [vmem:[#allocation2 + $0x18] sm:$0xff]
    %v32 = vld [vmem:[#allocation2 + $0x20] sm:$0xff]
    %v33 = vld [vmem:[#allocation2 + $0x28] sm:$0xff]
    %v34 = vld [vmem:[#allocation2 + $0x30] sm:$0xff]
    %v35 = vld [vmem:[#allocation2 + $0x38] sm:$0xff]
    %v36 = vld [vmem:[#allocation2 + $0x40] sm:$0xff]
    %v37 = vld [vmem:[#allocation2 + $0x48] sm:$0xff]
    %v38 = vld [vmem:[#allocation2 + $0x50] sm:$0xff]
    %v39 = vld [vmem:[#allocation2 + $0x58] sm:$0xff]
    %v40 = vld [vmem:[#allocation2 + $0x60] sm:$0xff]
    %v41 = vld [vmem:[#allocation2 + $0x68] sm:$0xff]
    %v42 = vld [vmem:[#allocation2 + $0x70] sm:$0xff]
    %v43 = vld [vmem:[#allocation2 + $0x78] sm:$0xff]
    %v44 = vld [vmem:[#allocation2 + $0x80] sm:$0xff]
    %v45 = vld [vmem:[#allocation2 + $0x88] sm:$0xff]
    %v46 = vld [vmem:[#allocation2 + $0x90] sm:$0xff]
    %v47 = vld [vmem:[#allocation2 + $0x98] sm:$0xff]
    %v48 = vld [vmem:[#allocation2 + $0xa0] sm:$0xff]
    %v49 = vld [vmem:[#allocation2 + $0xa8] sm:$0xff]
    %v50 = vld [vmem:[#allocation2 + $0xb0] sm:$0xff]
    %v51 = vld [vmem:[#allocation2 + $0xb8] sm:$0xff]
    %v52 = vld [vmem:[#allocation2 + $0xc0] sm:$0xff]
    %v53 = vld [vmem:[#allocation2 + $0xc8] sm:$0xff]
    %v54 = vld [vmem:[#allocation2 + $0xd0] sm:$0xff]
    %v55 = vld [vmem:[#allocation2 + $0xd8] sm:$0xff]
    %v56 = vld [vmem:[#allocation2 + $0xe0] sm:$0x1]
    %v57 = vld [vmem:[#allocation2 + $0xe1] sm:$0x1]
    %v58 = vld [vmem:[#allocation2 + $0xe2] sm:$0x1]
    %v59 = vld [vmem:[#allocation2 + $0xe3] sm:$0x1]
    %v60 = vld [vmem:[#allocation2 + $0xe4] sm:$0x1]
    %v61 = vld [vmem:[#allocation2 + $0xe5] sm:$0x1]
    %v62 = vld [vmem:[#allocation2 + $0xe6] sm:$0x1]
    %vm63 = vcmask 261120
    %v65 = vsel %vm63, %v25, 0
    %67 = vmatprep.subr.mxu0 0.0
    %68 = vmatpush1.msra.mxu0 %v28
    %69 = vmatprep.subr.mxu0 0.0
    %70 = vmatpush1.msra.mxu0 %v29
    %71 = vmatprep.subr.mxu0 0.0
    %72 = vmatpush1.msra.mxu0 %v30
    %73 = vmatprep.subr.mxu0 0.0
    %74 = vmatpush1.msra.mxu0 %v31
    %75 = vmatprep.subr.mxu0 0.0
    %76 = vmatpush1.msra.mxu0 0.0
    %77 = vmatprep.subr.mxu0 0.0
    %78 = vmatpush1.msra.mxu0 0.0
    %79 = vmatprep.subr.mxu0 0.0
    %80 = vmatpush1.msra.mxu0 0.0
    %81 = vmatprep.subr.mxu0 0.0
    %82 = vmatpush1.msra.mxu0 0.0
    %83 = vmatprep.subr.mxu0 0.0
    %84 = vmatpush1.msra.mxu0 0.0
    %85 = vmatprep.subr.mxu0 0.0
    %86 = vmatpush1.msra.mxu0 0.0
    %87 = vmatprep.subr.mxu0 0.0
    %88 = vmatpush1.msra.mxu0 0.0
    %89 = vmatprep.subr.mxu0 0.0
    %90 = vmatpush1.msra.mxu0 0.0
    %91 = vmatprep.subr.mxu0 0.0
    %92 = vmatpush1.msra.mxu0 0.0
    %93 = vmatprep.subr.mxu0 0.0
    %94 = vmatpush1.msra.mxu0 0.0
    %95 = vmatprep.subr.mxu0 0.0
    %96 = vmatpush1.msra.mxu0 0.0
    %97 = vmatprep.subr.mxu0 0.0
    %98 = vmatpush1.msra.mxu0 0.0
    %99 = vmatprep.subr.mxu0 0.0
    %100 = vmatpush1.msra.mxu0 0.0
    %101 = vmatprep.subr.mxu0 0.0
    %102 = vmatpush1.msra.mxu0 0.0
    %103 = vmatprep.subr.mxu0 0.0
    %104 = vmatpush1.msra.mxu0 0.0
    %105 = vmatprep.subr.mxu0 0.0
    %106 = vmatpush1.msra.mxu0 0.0
    %107 = vmatprep.subr.mxu0 0.0
    %108 = vmatpush1.msra.mxu0 0.0
    %109 = vmatprep.subr.mxu0 0.0
    %110 = vmatpush1.msra.mxu0 0.0
    %111 = vmatprep.subr.mxu0 0.0
    %112 = vmatpush1.msra.mxu0 0.0
    %113 = vmatprep.subr.mxu0 0.0
    %114 = vmatpush1.msra.mxu0 0.0
    %115 = vmatprep.subr.mxu0 0.0
    %116 = vmatpush1.msra.mxu0 0.0
    %117 = vmatprep.subr.mxu0 0.0
    %118 = vmatpush1.msra.mxu0 0.0
    %119 = vmatprep.subr.mxu0 0.0
    %120 = vmatpush1.msra.mxu0 0.0
    %121 = vmatprep.subr.mxu0 0.0
    %122 = vmatpush1.msra.mxu0 0.0
    %123 = vmatprep.subr.mxu0 0.0
    %124 = vmatpush1.msra.mxu0 0.0
    %125 = vmatprep.subr.mxu0 0.0
    %126 = vmatpush1.msra.mxu0 0.0
    %127 = vmatprep.subr.mxu0 0.0
    %128 = vmatpush1.msra.mxu0 0.0
    %129 = vmatprep.subr.mxu0 0.0
    %130 = vmatpush1.msra.mxu0 0.0
    %131 = vmatprep.mubr.f32.mxu0 0.0
    %132 = vmatmul.mubr.f32.gmra.mrb[0].mxu0 %v65
    %v133 = vpop.f32.mrb[0].mxu0
    %v134 = vadd.f32 0.0, %v133
    %v135 = vpop.f32.mrb[0].mxu0
    %136 = vdwg.mxu0
    %v138 = vsel %vm63, %v26, 0
    %140 = vmatprep.subr.mxu0 0.0
    %141 = vmatpush1.msra.mxu0 %v32
    %142 = vmatprep.subr.mxu0 0.0
    %143 = vmatpush1.msra.mxu0 %v33
    %144 = vmatprep.subr.mxu0 0.0
    %145 = vmatpush1.msra.mxu0 %v34
    %146 = vmatprep.subr.mxu0 0.0
    %147 = vmatpush1.msra.mxu0 %v35
    %148 = vmatprep.subr.mxu0 0.0
    %149 = vmatpush1.msra.mxu0 0.0
    %150 = vmatprep.subr.mxu0 0.0
    %151 = vmatpush1.msra.mxu0 0.0
    %152 = vmatprep.subr.mxu0 0.0
    %153 = vmatpush1.msra.mxu0 0.0
    %154 = vmatprep.subr.mxu0 0.0
    %155 = vmatpush1.msra.mxu0 0.0
    %156 = vmatprep.subr.mxu0 0.0
    %157 = vmatpush1.msra.mxu0 0.0
    %158 = vmatprep.subr.mxu0 0.0
    %159 = vmatpush1.msra.mxu0 0.0
    %160 = vmatprep.subr.mxu0 0.0
    %161 = vmatpush1.msra.mxu0 0.0
    %162 = vmatprep.subr.mxu0 0.0
    %163 = vmatpush1.msra.mxu0 0.0
    %164 = vmatprep.subr.mxu0 0.0
    %165 = vmatpush1.msra.mxu0 0.0
    %166 = vmatprep.subr.mxu0 0.0
    %167 = vmatpush1.msra.mxu0 0.0
    %168 = vmatprep.subr.mxu0 0.0
    %169 = vmatpush1.msra.mxu0 0.0
    %170 = vmatprep.subr.mxu0 0.0
    %171 = vmatpush1.msra.mxu0 0.0
    %172 = vmatprep.subr.mxu0 0.0
    %173 = vmatpush1.msra.mxu0 0.0
    %174 = vmatprep.subr.mxu0 0.0
    %175 = vmatpush1.msra.mxu0 0.0
    %176 = vmatprep.subr.mxu0 0.0
    %177 = vmatpush1.msra.mxu0 0.0
    %178 = vmatprep.subr.mxu0 0.0
    %179 = vmatpush1.msra.mxu0 0.0
    %180 = vmatprep.subr.mxu0 0.0
    %181 = vmatpush1.msra.mxu0 0.0
    %182 = vmatprep.subr.mxu0 0.0
    %183 = vmatpush1.msra.mxu0 0.0
    %184 = vmatprep.subr.mxu0 0.0
    %185 = vmatpush1.msra.mxu0 0.0
    %186 = vmatprep.subr.mxu0 0.0
    %187 = vmatpush1.msra.mxu0 0.0
    %188 = vmatprep.subr.mxu0 0.0
    %189 = vmatpush1.msra.mxu0 0.0
    %190 = vmatprep.subr.mxu0 0.0
    %191 = vmatpush1.msra.mxu0 0.0
    %192 = vmatprep.subr.mxu0 0.0
    %193 = vmatpush1.msra.mxu0 0.0
    %194 = vmatprep.subr.mxu0 0.0
    %195 = vmatpush1.msra.mxu0 0.0
    %196 = vmatprep.subr.mxu0 0.0
    %197 = vmatpush1.msra.mxu0 0.0
    %198 = vmatprep.subr.mxu0 0.0
    %199 = vmatpush1.msra.mxu0 0.0
    %200 = vmatprep.subr.mxu0 0.0
    %201 = vmatpush1.msra.mxu0 0.0
    %202 = vmatprep.subr.mxu0 0.0
    %203 = vmatpush1.msra.mxu0 0.0
    %204 = vmatprep.mubr.f32.mxu0 0.0
    %205 = vmatmul.mubr.f32.gmra.mrb[0].mxu0 %v138
    %v206 = vpop.f32.mrb[0].mxu0
    %v207 = vadd.f32 0.0, %v206
    %v208 = vpop.f32.mrb[0].mxu0
    %209 = vdwg.mxu0
    %v211 = vsel %vm63, %v27, 0
    %213 = vmatprep.subr.mxu0 0.0
    %214 = vmatpush1.msra.mxu0 %v36
    %215 = vmatprep.subr.mxu0 0.0
    %216 = vmatpush1.msra.mxu0 %v37
    %217 = vmatprep.subr.mxu0 0.0
    %218 = vmatpush1.msra.mxu0 %v38
    %219 = vmatprep.subr.mxu0 0.0
    %220 = vmatpush1.msra.mxu0 %v39
    %221 = vmatprep.subr.mxu0 0.0
    %222 = vmatpush1.msra.mxu0 0.0
    %223 = vmatprep.subr.mxu0 0.0
    %224 = vmatpush1.msra.mxu0 0.0
    %225 = vmatprep.subr.mxu0 0.0
    %226 = vmatpush1.msra.mxu0 0.0
    %227 = vmatprep.subr.mxu0 0.0
    %228 = vmatpush1.msra.mxu0 0.0
    %229 = vmatprep.subr.mxu0 0.0
    %230 = vmatpush1.msra.mxu0 0.0
    %231 = vmatprep.subr.mxu0 0.0
    %232 = vmatpush1.msra.mxu0 0.0
    %233 = vmatprep.subr.mxu0 0.0
    %234 = vmatpush1.msra.mxu0 0.0
    %235 = vmatprep.subr.mxu0 0.0
    %236 = vmatpush1.msra.mxu0 0.0
    %237 = vmatprep.subr.mxu0 0.0
    %238 = vmatpush1.msra.mxu0 0.0
    %239 = vmatprep.subr.mxu0 0.0
    %240 = vmatpush1.msra.mxu0 0.0
    %241 = vmatprep.subr.mxu0 0.0
    %242 = vmatpush1.msra.mxu0 0.0
    %243 = vmatprep.subr.mxu0 0.0
    %244 = vmatpush1.msra.mxu0 0.0
    %245 = vmatprep.subr.mxu0 0.0
    %246 = vmatpush1.msra.mxu0 0.0
    %247 = vmatprep.subr.mxu0 0.0
    %248 = vmatpush1.msra.mxu0 0.0
    %249 = vmatprep.subr.mxu0 0.0
    %250 = vmatpush1.msra.mxu0 0.0
    %251 = vmatprep.subr.mxu0 0.0
    %252 = vmatpush1.msra.mxu0 0.0
    %253 = vmatprep.subr.mxu0 0.0
    %254 = vmatpush1.msra.mxu0 0.0
    %255 = vmatprep.subr.mxu0 0.0
    %256 = vmatpush1.msra.mxu0 0.0
    %257 = vmatprep.subr.mxu0 0.0
    %258 = vmatpush1.msra.mxu0 0.0
    %259 = vmatprep.subr.mxu0 0.0
    %260 = vmatpush1.msra.mxu0 0.0
    %261 = vmatprep.subr.mxu0 0.0
    %262 = vmatpush1.msra.mxu0 0.0
    %263 = vmatprep.subr.mxu0 0.0
    %264 = vmatpush1.msra.mxu0 0.0
    %265 = vmatprep.subr.mxu0 0.0
    %266 = vmatpush1.msra.mxu0 0.0
    %267 = vmatprep.subr.mxu0 0.0
    %268 = vmatpush1.msra.mxu0 0.0
    %269 = vmatprep.subr.mxu0 0.0
    %270 = vmatpush1.msra.mxu0 0.0
    %271 = vmatprep.subr.mxu0 0.0
    %272 = vmatpush1.msra.mxu0 0.0
    %273 = vmatprep.subr.mxu0 0.0
    %274 = vmatpush1.msra.mxu0 0.0
    %275 = vmatprep.subr.mxu0 0.0
    %276 = vmatpush1.msra.mxu0 0.0
    %277 = vmatprep.mubr.f32.mxu0 0.0
    %278 = vmatmul.mubr.f32.gmra.mrb[0].mxu0 %v211
    %v279 = vpop.f32.mrb[0].mxu0
    %v280 = vadd.f32 0.0, %v279
    %v281 = vpop.f32.mrb[0].mxu0
    %282 = vdwg.mxu0
    %v283 = vld [vmem:[#allocation2 + $0xe8] sm:$0x1]
    %v284 = vlaneseq
    %v285 = vshrl.u32 %v284, 7
    %v286 = vsub.s32 0, %v285
    %v287 = vrot.slane %v283, %v286
    %v288 = vmul.f32 %v207, %v287
    %v289 = vmul.f32 %v280, %v287
    %v291 = vsel %vm63, %v134, 0
    %v294 = vsel %vm63, %v288, 0
    %296 = vmatprep.subr.mxu0 0.0
    %297 = vmatpush1.xpose.msra.mxu0 %v294
    %298 = vmatprep.subr.mxu0 0.0
    %299 = vmatpush1.xpose.msra.mxu0 0.0
    %300 = vmatprep.subr.mxu0 0.0
    %301 = vmatpush1.xpose.msra.mxu0 0.0
    %302 = vmatprep.subr.mxu0 0.0
    %303 = vmatpush1.xpose.msra.mxu0 0.0
    %304 = vmatprep.subr.mxu0 0.0
    %305 = vmatpush1.xpose.msra.mxu0 0.0
    %306 = vmatprep.subr.mxu0 0.0
    %307 = vmatpush1.xpose.msra.mxu0 0.0
    %308 = vmatprep.subr.mxu0 0.0
    %309 = vmatpush1.xpose.msra.mxu0 0.0
    %310 = vmatprep.subr.mxu0 0.0
    %311 = vmatpush1.xpose.msra.mxu0 0.0
    %312 = vmatprep.subr.mxu0 0.0
    %313 = vmatpush1.xpose.msra.mxu0 0.0
    %314 = vmatprep.subr.mxu0 0.0
    %315 = vmatpush1.xpose.msra.mxu0 0.0
    %316 = vmatprep.subr.mxu0 0.0
    %317 = vmatpush1.xpose.msra.mxu0 0.0
    %318 = vmatprep.subr.mxu0 0.0
    %319 = vmatpush1.xpose.msra.mxu0 0.0
    %320 = vmatprep.subr.mxu0 0.0
    %321 = vmatpush1.xpose.msra.mxu0 0.0
    %322 = vmatprep.subr.mxu0 0.0
    %323 = vmatpush1.xpose.msra.mxu0 0.0
    %324 = vmatprep.subr.mxu0 0.0
    %325 = vmatpush1.xpose.msra.mxu0 0.0
    %326 = vmatprep.subr.mxu0 0.0
    %327 = vmatpush1.xpose.msra.mxu0 0.0
    %328 = vmatprep.subr.mxu0 0.0
    %329 = vmatpush1.xpose.msra.mxu0 0.0
    %330 = vmatprep.subr.mxu0 0.0
    %331 = vmatpush1.xpose.msra.mxu0 0.0
    %332 = vmatprep.subr.mxu0 0.0
    %333 = vmatpush1.xpose.msra.mxu0 0.0
    %334 = vmatprep.subr.mxu0 0.0
    %335 = vmatpush1.xpose.msra.mxu0 0.0
    %336 = vmatprep.subr.mxu0 0.0
    %337 = vmatpush1.xpose.msra.mxu0 0.0
    %338 = vmatprep.subr.mxu0 0.0
    %339 = vmatpush1.xpose.msra.mxu0 0.0
    %340 = vmatprep.subr.mxu0 0.0
    %341 = vmatpush1.xpose.msra.mxu0 0.0
    %342 = vmatprep.subr.mxu0 0.0
    %343 = vmatpush1.xpose.msra.mxu0 0.0
    %344 = vmatprep.subr.mxu0 0.0
    %345 = vmatpush1.xpose.msra.mxu0 0.0
    %346 = vmatprep.subr.mxu0 0.0
    %347 = vmatpush1.xpose.msra.mxu0 0.0
    %348 = vmatprep.subr.mxu0 0.0
    %349 = vmatpush1.xpose.msra.mxu0 0.0
    %350 = vmatprep.subr.mxu0 0.0
    %351 = vmatpush1.xpose.msra.mxu0 0.0
    %352 = vmatprep.subr.mxu0 0.0
    %353 = vmatpush1.xpose.msra.mxu0 0.0
    %354 = vmatprep.subr.mxu0 0.0
    %355 = vmatpush1.xpose.msra.mxu0 0.0
    %356 = vmatprep.subr.mxu0 0.0
    %357 = vmatpush1.xpose.msra.mxu0 0.0
    %358 = vmatprep.subr.mxu0 0.0
    %359 = vmatpush1.xpose.msra.mxu0 0.0
    %360 = vmatprep.mubr.f32.mxu0 0.0
    %361 = vmatmul.mubr.f32.gmra.mrb[0].mxu0 %v291
    %v362 = vpop.f32.mrb[0].mxu0
    %v363 = vadd.f32 0.0, %v362
    %v364 = vpop.f32.mrb[0].mxu0
    %365 = vdwg.mxu0
    %vm366 = vcmask 64512
    %v367 = vsel %vm366, %v363, -inf
    %368 = vmax.xlane.f32.xlu0 %v367
    %v369 = vpop.xlane.xlu0 %368
    %v370 = vsub.f32 %v363, %v369
    %v371 = vmul.f32 %v370, 1.442695
    %v372 = vpow.pop %v371
    %v373 = vsel %vm366, %v372, 0.0
    %374 = vadd.xlane.f32.xlu0 %v373
    %v375 = vpop.xlane.xlu0 %374
    %v376 = vrcp.pop %v375
    %v377 = vmul.f32 %v372, %v376
    %v378 = vld [vmem:[#allocation2 + $0xe9] sm:$0x1]
    %v379 = vlaneseq
    %v380 = vshrl.u32 %v379, 7
    %v381 = vsub.s32 0, %v380
    %v382 = vrot.slane %v378, %v381
    %v383 = vmul.f32 %v207, %v382
    %v384 = vmul.f32 %v280, %v382
    %v386 = vsel %vm63, %v383, 0
    %388 = vmatprep.subr.mxu0 0.0
    %389 = vmatpush1.xpose.msra.mxu0 %v386
    %390 = vmatprep.subr.mxu0 0.0
    %391 = vmatpush1.xpose.msra.mxu0 0.0
    %392 = vmatprep.subr.mxu0 0.0
    %393 = vmatpush1.xpose.msra.mxu0 0.0
    %394 = vmatprep.subr.mxu0 0.0
    %395 = vmatpush1.xpose.msra.mxu0 0.0
    %396 = vmatprep.subr.mxu0 0.0
    %397 = vmatpush1.xpose.msra.mxu0 0.0
    %398 = vmatprep.subr.mxu0 0.0
    %399 = vmatpush1.xpose.msra.mxu0 0.0
    %400 = vmatprep.subr.mxu0 0.0
    %401 = vmatpush1.xpose.msra.mxu0 0.0
    %402 = vmatprep.subr.mxu0 0.0
    %403 = vmatpush1.xpose.msra.mxu0 0.0
    %404 = vmatprep.subr.mxu0 0.0
    %405 = vmatpush1.xpose.msra.mxu0 0.0
    %406 = vmatprep.subr.mxu0 0.0
    %407 = vmatpush1.xpose.msra.mxu0 0.0
    %408 = vmatprep.subr.mxu0 0.0
    %409 = vmatpush1.xpose.msra.mxu0 0.0
    %410 = vmatprep.subr.mxu0 0.0
    %411 = vmatpush1.xpose.msra.mxu0 0.0
    %412 = vmatprep.subr.mxu0 0.0
    %413 = vmatpush1.xpose.msra.mxu0 0.0
    %414 = vmatprep.subr.mxu0 0.0
    %415 = vmatpush1.xpose.msra.mxu0 0.0
    %416 = vmatprep.subr.mxu0 0.0
    %417 = vmatpush1.xpose.msra.mxu0 0.0
    %418 = vmatprep.subr.mxu0 0.0
    %419 = vmatpush1.xpose.msra.mxu0 0.0
    %420 = vmatprep.subr.mxu0 0.0
    %421 = vmatpush1.xpose.msra.mxu0 0.0
    %422 = vmatprep.subr.mxu0 0.0
    %423 = vmatpush1.xpose.msra.mxu0 0.0
    %424 = vmatprep.subr.mxu0 0.0
    %425 = vmatpush1.xpose.msra.mxu0 0.0
    %426 = vmatprep.subr.mxu0 0.0
    %427 = vmatpush1.xpose.msra.mxu0 0.0
    %428 = vmatprep.subr.mxu0 0.0
    %429 = vmatpush1.xpose.msra.mxu0 0.0
    %430 = vmatprep.subr.mxu0 0.0
    %431 = vmatpush1.xpose.msra.mxu0 0.0
    %432 = vmatprep.subr.mxu0 0.0
    %433 = vmatpush1.xpose.msra.mxu0 0.0
    %434 = vmatprep.subr.mxu0 0.0
    %435 = vmatpush1.xpose.msra.mxu0 0.0
    %436 = vmatprep.subr.mxu0 0.0
    %437 = vmatpush1.xpose.msra.mxu0 0.0
    %438 = vmatprep.subr.mxu0 0.0
    %439 = vmatpush1.xpose.msra.mxu0 0.0
    %440 = vmatprep.subr.mxu0 0.0
    %441 = vmatpush1.xpose.msra.mxu0 0.0
    %442 = vmatprep.subr.mxu0 0.0
    %443 = vmatpush1.xpose.msra.mxu0 0.0
    %444 = vmatprep.subr.mxu0 0.0
    %445 = vmatpush1.xpose.msra.mxu0 0.0
    %446 = vmatprep.subr.mxu0 0.0
    %447 = vmatpush1.xpose.msra.mxu0 0.0
    %448 = vmatprep.subr.mxu0 0.0
    %449 = vmatpush1.xpose.msra.mxu0 0.0
    %450 = vmatprep.subr.mxu0 0.0
    %451 = vmatpush1.xpose.msra.mxu0 0.0
    %452 = vmatprep.mubr.f32.mxu0 0.0
    %453 = vmatmul.mubr.f32.gmra.mrb[0].mxu0 %v291
    %v454 = vpop.f32.mrb[0].mxu0
    %v455 = vadd.f32 0.0, %v454
    %v456 = vpop.f32.mrb[0].mxu0
    %457 = vdwg.mxu0
    %v458 = vsel %vm366, %v455, -inf
    %459 = vmax.xlane.f32.xlu0 %v458
    %v460 = vpop.xlane.xlu0 %459
    %v461 = vsub.f32 %v455, %v460
    %v462 = vmul.f32 %v461, 1.442695
    %v463 = vpow.pop %v462
    %v464 = vsel %vm366, %v463, 0.0
    %465 = vadd.xlane.f32.xlu0 %v464
    %v466 = vpop.xlane.xlu0 %465
    %v467 = vrcp.pop %v466
    %v468 = vmul.f32 %v463, %v467
    %v470 = vsel %vm366, %v468, 0
    %472 = vmatprep.subr.mxu0 0.0
    %473 = vmatpush1.msra.mxu0 %v384
    %474 = vmatprep.subr.mxu0 0.0
    %475 = vmatpush1.msra.mxu0 0.0
    %476 = vmatprep.subr.mxu0 0.0
    %477 = vmatpush1.msra.mxu0 0.0
    %478 = vmatprep.subr.mxu0 0.0
    %479 = vmatpush1.msra.mxu0 0.0
    %480 = vmatprep.subr.mxu0 0.0
    %481 = vmatpush1.msra.mxu0 0.0
    %482 = vmatprep.subr.mxu0 0.0
    %483 = vmatpush1.msra.mxu0 0.0
    %484 = vmatprep.subr.mxu0 0.0
    %485 = vmatpush1.msra.mxu0 0.0
    %486 = vmatprep.subr.mxu0 0.0
    %487 = vmatpush1.msra.mxu0 0.0
    %488 = vmatprep.subr.mxu0 0.0
    %489 = vmatpush1.msra.mxu0 0.0
    %490 = vmatprep.subr.mxu0 0.0
    %491 = vmatpush1.msra.mxu0 0.0
    %492 = vmatprep.subr.mxu0 0.0
    %493 = vmatpush1.msra.mxu0 0.0
    %494 = vmatprep.subr.mxu0 0.0
    %495 = vmatpush1.msra.mxu0 0.0
    %496 = vmatprep.subr.mxu0 0.0
    %497 = vmatpush1.msra.mxu0 0.0
    %498 = vmatprep.subr.mxu0 0.0
    %499 = vmatpush1.msra.mxu0 0.0
    %500 = vmatprep.subr.mxu0 0.0
    %501 = vmatpush1.msra.mxu0 0.0
    %502 = vmatprep.subr.mxu0 0.0
    %503 = vmatpush1.msra.mxu0 0.0
    %504 = vmatprep.subr.mxu0 0.0
    %505 = vmatpush1.msra.mxu0 0.0
    %506 = vmatprep.subr.mxu0 0.0
    %507 = vmatpush1.msra.mxu0 0.0
    %508 = vmatprep.subr.mxu0 0.0
    %509 = vmatpush1.msra.mxu0 0.0
    %510 = vmatprep.subr.mxu0 0.0
    %511 = vmatpush1.msra.mxu0 0.0
    %512 = vmatprep.subr.mxu0 0.0
    %513 = vmatpush1.msra.mxu0 0.0
    %514 = vmatprep.subr.mxu0 0.0
    %515 = vmatpush1.msra.mxu0 0.0
    %516 = vmatprep.subr.mxu0 0.0
    %517 = vmatpush1.msra.mxu0 0.0
    %518 = vmatprep.subr.mxu0 0.0
    %519 = vmatpush1.msra.mxu0 0.0
    %520 = vmatprep.subr.mxu0 0.0
    %521 = vmatpush1.msra.mxu0 0.0
    %522 = vmatprep.subr.mxu0 0.0
    %523 = vmatpush1.msra.mxu0 0.0
    %524 = vmatprep.subr.mxu0 0.0
    %525 = vmatpush1.msra.mxu0 0.0
    %526 = vmatprep.subr.mxu0 0.0
    %527 = vmatpush1.msra.mxu0 0.0
    %528 = vmatprep.subr.mxu0 0.0
    %529 = vmatpush1.msra.mxu0 0.0
    %530 = vmatprep.subr.mxu0 0.0
    %531 = vmatpush1.msra.mxu0 0.0
    %532 = vmatprep.subr.mxu0 0.0
    %533 = vmatpush1.msra.mxu0 0.0
    %534 = vmatprep.subr.mxu0 0.0
    %535 = vmatpush1.msra.mxu0 0.0
    %536 = vmatprep.mubr.f32.mxu0 0.0
    %537 = vmatmul.mubr.f32.gmra.mrb[0].mxu0 %v470
    %v538 = vpop.f32.mrb[0].mxu0
    %v539 = vadd.f32 0.0, %v538
    %v540 = vpop.f32.mrb[0].mxu0
    %541 = vdwg.mxu0
    %v543 = vsel %vm366, %v377, 0
    %545 = vmatprep.subr.mxu0 0.0
    %546 = vmatpush1.msra.mxu0 %v289
    %547 = vmatprep.subr.mxu0 0.0
    %548 = vmatpush1.msra.mxu0 0.0
    %549 = vmatprep.subr.mxu0 0.0
    %550 = vmatpush1.msra.mxu0 0.0
    %551 = vmatprep.subr.mxu0 0.0
    %552 = vmatpush1.msra.mxu0 0.0
    %553 = vmatprep.subr.mxu0 0.0
    %554 = vmatpush1.msra.mxu0 0.0
    %555 = vmatprep.subr.mxu0 0.0
    %556 = vmatpush1.msra.mxu0 0.0
    %557 = vmatprep.subr.mxu0 0.0
    %558 = vmatpush1.msra.mxu0 0.0
    %559 = vmatprep.subr.mxu0 0.0
    %560 = vmatpush1.msra.mxu0 0.0
    %561 = vmatprep.subr.mxu0 0.0
    %562 = vmatpush1.msra.mxu0 0.0
    %563 = vmatprep.subr.mxu0 0.0
    %564 = vmatpush1.msra.mxu0 0.0
    %565 = vmatprep.subr.mxu0 0.0
    %566 = vmatpush1.msra.mxu0 0.0
    %567 = vmatprep.subr.mxu0 0.0
    %568 = vmatpush1.msra.mxu0 0.0
    %569 = vmatprep.subr.mxu0 0.0
    %570 = vmatpush1.msra.mxu0 0.0
    %571 = vmatprep.subr.mxu0 0.0
    %572 = vmatpush1.msra.mxu0 0.0
    %573 = vmatprep.subr.mxu0 0.0
    %574 = vmatpush1.msra.mxu0 0.0
    %575 = vmatprep.subr.mxu0 0.0
    %576 = vmatpush1.msra.mxu0 0.0
    %577 = vmatprep.subr.mxu0 0.0
    %578 = vmatpush1.msra.mxu0 0.0
    %579 = vmatprep.subr.mxu0 0.0
    %580 = vmatpush1.msra.mxu0 0.0
    %581 = vmatprep.subr.mxu0 0.0
    %582 = vmatpush1.msra.mxu0 0.0
    %583 = vmatprep.subr.mxu0 0.0
    %584 = vmatpush1.msra.mxu0 0.0
    %585 = vmatprep.subr.mxu0 0.0
    %586 = vmatpush1.msra.mxu0 0.0
    %587 = vmatprep.subr.mxu0 0.0
    %588 = vmatpush1.msra.mxu0 0.0
    %589 = vmatprep.subr.mxu0 0.0
    %590 = vmatpush1.msra.mxu0 0.0
    %591 = vmatprep.subr.mxu0 0.0
    %592 = vmatpush1.msra.mxu0 0.0
    %593 = vmatprep.subr.mxu0 0.0
    %594 = vmatpush1.msra.mxu0 0.0
    %595 = vmatprep.subr.mxu0 0.0
    %596 = vmatpush1.msra.mxu0 0.0
    %597 = vmatprep.subr.mxu0 0.0
    %598 = vmatpush1.msra.mxu0 0.0
    %599 = vmatprep.subr.mxu0 0.0
    %600 = vmatpush1.msra.mxu0 0.0
    %601 = vmatprep.subr.mxu0 0.0
    %602 = vmatpush1.msra.mxu0 0.0
    %603 = vmatprep.subr.mxu0 0.0
    %604 = vmatpush1.msra.mxu0 0.0
    %605 = vmatprep.subr.mxu0 0.0
    %606 = vmatpush1.msra.mxu0 0.0
    %607 = vmatprep.subr.mxu0 0.0
    %608 = vmatpush1.msra.mxu0 0.0
    %609 = vmatprep.mubr.f32.mxu0 0.0
    %610 = vmatmul.mubr.f32.gmra.mrb[0].mxu0 %v543
    %v611 = vpop.f32.mrb[0].mxu0
    %v612 = vadd.f32 %v539, %v611
    %v613 = vpop.f32.mrb[0].mxu0
    %614 = vdwg.mxu0
    %v615 = vlaneseq
    %v616 = vshrl.u32 %v615, 7
    %v617 = vsub.s32 0, %v616
    %v618 = vrot.slane %v56, %v617
    %v620 = vsel %vm63, %v612, 0
    %622 = vmatprep.subr.mxu0 0.0
    %623 = vmatpush1.msra.mxu0 %v40
    %624 = vmatprep.subr.mxu0 0.0
    %625 = vmatpush1.msra.mxu0 %v41
    %626 = vmatprep.subr.mxu0 0.0
    %627 = vmatpush1.msra.mxu0 %v42
    %628 = vmatprep.subr.mxu0 0.0
    %629 = vmatpush1.msra.mxu0 %v43
    %630 = vmatprep.subr.mxu0 0.0
    %631 = vmatpush1.msra.mxu0 0.0
    %632 = vmatprep.subr.mxu0 0.0
    %633 = vmatpush1.msra.mxu0 0.0
    %634 = vmatprep.subr.mxu0 0.0
    %635 = vmatpush1.msra.mxu0 0.0
    %636 = vmatprep.subr.mxu0 0.0
    %637 = vmatpush1.msra.mxu0 0.0
    %638 = vmatprep.subr.mxu0 0.0
    %639 = vmatpush1.msra.mxu0 0.0
    %640 = vmatprep.subr.mxu0 0.0
    %641 = vmatpush1.msra.mxu0 0.0
    %642 = vmatprep.subr.mxu0 0.0
    %643 = vmatpush1.msra.mxu0 0.0
    %644 = vmatprep.subr.mxu0 0.0
    %645 = vmatpush1.msra.mxu0 0.0
    %646 = vmatprep.subr.mxu0 0.0
    %647 = vmatpush1.msra.mxu0 0.0
    %648 = vmatprep.subr.mxu0 0.0
    %649 = vmatpush1.msra.mxu0 0.0
    %650 = vmatprep.subr.mxu0 0.0
    %651 = vmatpush1.msra.mxu0 0.0
    %652 = vmatprep.subr.mxu0 0.0
    %653 = vmatpush1.msra.mxu0 0.0
    %654 = vmatprep.subr.mxu0 0.0
    %655 = vmatpush1.msra.mxu0 0.0
    %656 = vmatprep.subr.mxu0 0.0
    %657 = vmatpush1.msra.mxu0 0.0
    %658 = vmatprep.subr.mxu0 0.0
    %659 = vmatpush1.msra.mxu0 0.0
    %660 = vmatprep.subr.mxu0 0.0
    %661 = vmatpush1.msra.mxu0 0.0
    %662 = vmatprep.subr.mxu0 0.0
    %663 = vmatpush1.msra.mxu0 0.0
    %664 = vmatprep.subr.mxu0 0.0
    %665 = vmatpush1.msra.mxu0 0.0
    %666 = vmatprep.subr.mxu0 0.0
    %667 = vmatpush1.msra.mxu0 0.0
    %668 = vmatprep.subr.mxu0 0.0
    %669 = vmatpush1.msra.mxu0 0.0
    %670 = vmatprep.subr.mxu0 0.0
    %671 = vmatpush1.msra.mxu0 0.0
    %672 = vmatprep.subr.mxu0 0.0
    %673 = vmatpush1.msra.mxu0 0.0
    %674 = vmatprep.subr.mxu0 0.0
    %675 = vmatpush1.msra.mxu0 0.0
    %676 = vmatprep.subr.mxu0 0.0
    %677 = vmatpush1.msra.mxu0 0.0
    %678 = vmatprep.subr.mxu0 0.0
    %679 = vmatpush1.msra.mxu0 0.0
    %680 = vmatprep.subr.mxu0 0.0
    %681 = vmatpush1.msra.mxu0 0.0
    %682 = vmatprep.subr.mxu0 0.0
    %683 = vmatpush1.msra.mxu0 0.0
    %684 = vmatprep.subr.mxu0 0.0
    %685 = vmatpush1.msra.mxu0 0.0
    %686 = vmatprep.mubr.f32.mxu0 0.0
    %687 = vmatmul.mubr.f32.gmra.mrb[0].mxu0 %v620
    %v688 = vpop.f32.mrb[0].mxu0
    %v689 = vadd.f32 %v618, %v688
    %v690 = vpop.f32.mrb[0].mxu0
    %691 = vdwg.mxu0
    %v692 = vadd.f32 %v689, %v27
    %v693 = vsel %vm63, %v692, 0.0
    %694 = vadd.xlane.f32.xlu0 %v693
    %v695 = vpop.xlane.xlu0 %694
    %v696 = vrcp.pop 32.0
    %v697 = vmul.f32 %v695, %v696
    %v698 = vsub.f32 %v692, %v697
    %v699 = vmul.f32 %v698, %v698
    %v700 = vsel %vm63, %v699, 0.0
    %701 = vadd.xlane.f32.xlu0 %v700
    %v702 = vpop.xlane.xlu0 %701
    %v703 = vmul.f32 %v702, %v696
    %v704 = vadd.f32 %v703, 1e-05
    %v705 = vrsqrt.pop %v704
    %v706 = vmul.f32 %v698, %v705
    %v707 = vlaneseq
    %v708 = vshrl.u32 %v707, 7
    %v709 = vsub.s32 0, %v708
    %v710 = vrot.slane %v57, %v709
    %v711 = vmul.f32 %v706, %v710
    %v712 = vlaneseq
    %v713 = vshrl.u32 %v712, 7
    %v714 = vsub.s32 0, %v713
    %v715 = vrot.slane %v58, %v714
    %v716 = vadd.f32 %v711, %v715
    %v717 = vlaneseq
    %v718 = vshrl.u32 %v717, 7
    %v719 = vsub.s32 0, %v718
    %v720 = vrot.slane %v61, %v719
    %v722 = vsel %vm63, %v716, 0
    %724 = vmatprep.subr.mxu0 0.0
    %725 = vmatpush1.msra.mxu0 %v44
    %726 = vmatprep.subr.mxu0 0.0
    %727 = vmatpush1.msra.mxu0 %v45
    %728 = vmatprep.subr.mxu0 0.0
    %729 = vmatpush1.msra.mxu0 %v46
    %730 = vmatprep.subr.mxu0 0.0
    %731 = vmatpush1.msra.mxu0 %v47
    %732 = vmatprep.subr.mxu0 0.0
    %733 = vmatpush1.msra.mxu0 0.0
    %734 = vmatprep.subr.mxu0 0.0
    %735 = vmatpush1.msra.mxu0 0.0
    %736 = vmatprep.subr.mxu0 0.0
    %737 = vmatpush1.msra.mxu0 0.0
    %738 = vmatprep.subr.mxu0 0.0
    %739 = vmatpush1.msra.mxu0 0.0
    %740 = vmatprep.subr.mxu0 0.0
    %741 = vmatpush1.msra.mxu0 0.0
    %742 = vmatprep.subr.mxu0 0.0
    %743 = vmatpush1.msra.mxu0 0.0
    %744 = vmatprep.subr.mxu0 0.0
    %745 = vmatpush1.msra.mxu0 0.0
    %746 = vmatprep.subr.mxu0 0.0
    %747 = vmatpush1.msra.mxu0 0.0
    %748 = vmatprep.subr.mxu0 0.0
    %749 = vmatpush1.msra.mxu0 0.0
    %750 = vmatprep.subr.mxu0 0.0
    %751 = vmatpush1.msra.mxu0 0.0
    %752 = vmatprep.subr.mxu0 0.0
    %753 = vmatpush1.msra.mxu0 0.0
    %754 = vmatprep.subr.mxu0 0.0
    %755 = vmatpush1.msra.mxu0 0.0
    %756 = vmatprep.subr.mxu0 0.0
    %757 = vmatpush1.msra.mxu0 0.0
    %758 = vmatprep.subr.mxu0 0.0
    %759 = vmatpush1.msra.mxu0 0.0
    %760 = vmatprep.subr.mxu0 0.0
    %761 = vmatpush1.msra.mxu0 0.0
    %762 = vmatprep.subr.mxu0 0.0
    %763 = vmatpush1.msra.mxu0 0.0
    %764 = vmatprep.subr.mxu0 0.0
    %765 = vmatpush1.msra.mxu0 0.0
    %766 = vmatprep.subr.mxu0 0.0
    %767 = vmatpush1.msra.mxu0 0.0
    %768 = vmatprep.subr.mxu0 0.0
    %769 = vmatpush1.msra.mxu0 0.0
    %770 = vmatprep.subr.mxu0 0.0
    %771 = vmatpush1.msra.mxu0 0.0
    %772 = vmatprep.subr.mxu0 0.0
    %773 = vmatpush1.msra.mxu0 0.0
    %774 = vmatprep.subr.mxu0 0.0
    %775 = vmatpush1.msra.mxu0 0.0
    %776 = vmatprep.subr.mxu0 0.0
    %777 = vmatpush1.msra.mxu0 0.0
    %778 = vmatprep.subr.mxu0 0.0
    %779 = vmatpush1.msra.mxu0 0.0
    %780 = vmatprep.subr.mxu0 0.0
    %781 = vmatpush1.msra.mxu0 0.0
    %782 = vmatprep.subr.mxu0 0.0
    %783 = vmatpush1.msra.mxu0 0.0
    %784 = vmatprep.subr.mxu0 0.0
    %785 = vmatpush1.msra.mxu0 0.0
    %786 = vmatprep.subr.mxu0 0.0
    %787 = vmatpush1.msra.mxu0 0.0
    %788 = vmatprep.mubr.f32.mxu0 0.0
    %789 = vmatmul.mubr.f32.gmra.mrb[0].mxu0 %v722
    %v790 = vpop.f32.mrb[0].mxu0
    %v791 = vadd.f32 %v720, %v790
    %v792 = vpop.f32.mrb[0].mxu0
    %793 = vdwg.mxu0
    %v794 = vmax.f32 %v791, 0.0
    %v795 = vlaneseq
    %v796 = vshrl.u32 %v795, 7
    %v797 = vsub.s32 0, %v796
    %v798 = vrot.slane %v62, %v797
    %vm799 = vcmask 523264
    %v801 = vsel %vm799, %v794, 0
    %803 = vmatprep.subr.mxu0 0.0
    %804 = vmatpush1.msra.mxu0 %v48
    %805 = vmatprep.subr.mxu0 0.0
    %806 = vmatpush1.msra.mxu0 %v49
    %807 = vmatprep.subr.mxu0 0.0
    %808 = vmatpush1.msra.mxu0 %v50
    %809 = vmatprep.subr.mxu0 0.0
    %810 = vmatpush1.msra.mxu0 %v51
    %811 = vmatprep.subr.mxu0 0.0
    %812 = vmatpush1.msra.mxu0 %v52
    %813 = vmatprep.subr.mxu0 0.0
    %814 = vmatpush1.msra.mxu0 %v53
    %815 = vmatprep.subr.mxu0 0.0
    %816 = vmatpush1.msra.mxu0 %v54
    %817 = vmatprep.subr.mxu0 0.0
    %818 = vmatpush1.msra.mxu0 %v55
    %819 = vmatprep.subr.mxu0 0.0
    %820 = vmatpush1.msra.mxu0 0.0
    %821 = vmatprep.subr.mxu0 0.0
    %822 = vmatpush1.msra.mxu0 0.0
    %823 = vmatprep.subr.mxu0 0.0
    %824 = vmatpush1.msra.mxu0 0.0
    %825 = vmatprep.subr.mxu0 0.0
    %826 = vmatpush1.msra.mxu0 0.0
    %827 = vmatprep.subr.mxu0 0.0
    %828 = vmatpush1.msra.mxu0 0.0
    %829 = vmatprep.subr.mxu0 0.0
    %830 = vmatpush1.msra.mxu0 0.0
    %831 = vmatprep.subr.mxu0 0.0
    %832 = vmatpush1.msra.mxu0 0.0
    %833 = vmatprep.subr.mxu0 0.0
    %834 = vmatpush1.msra.mxu0 0.0
    %835 = vmatprep.subr.mxu0 0.0
    %836 = vmatpush1.msra.mxu0 0.0
    %837 = vmatprep.subr.mxu0 0.0
    %838 = vmatpush1.msra.mxu0 0.0
    %839 = vmatprep.subr.mxu0 0.0
    %840 = vmatpush1.msra.mxu0 0.0
    %841 = vmatprep.subr.mxu0 0.0
    %842 = vmatpush1.msra.mxu0 0.0
    %843 = vmatprep.subr.mxu0 0.0
    %844 = vmatpush1.msra.mxu0 0.0
    %845 = vmatprep.subr.mxu0 0.0
    %846 = vmatpush1.msra.mxu0 0.0
    %847 = vmatprep.subr.mxu0 0.0
    %848 = vmatpush1.msra.mxu0 0.0
    %849 = vmatprep.subr.mxu0 0.0
    %850 = vmatpush1.msra.mxu0 0.0
    %851 = vmatprep.subr.mxu0 0.0
    %852 = vmatpush1.msra.mxu0 0.0
    %853 = vmatprep.subr.mxu0 0.0
    %854 = vmatpush1.msra.mxu0 0.0
    %855 = vmatprep.subr.mxu0 0.0
    %856 = vmatpush1.msra.mxu0 0.0
    %857 = vmatprep.subr.mxu0 0.0
    %858 = vmatpush1.msra.mxu0 0.0
    %859 = vmatprep.subr.mxu0 0.0
    %860 = vmatpush1.msra.mxu0 0.0
    %861 = vmatprep.subr.mxu0 0.0
    %862 = vmatpush1.msra.mxu0 0.0
    %863 = vmatprep.subr.mxu0 0.0
    %864 = vmatpush1.msra.mxu0 0.0
    %865 = vmatprep.subr.mxu0 0.0
    %866 = vmatpush1.msra.mxu0 0.0
    %867 = vmatprep.mubr.f32.mxu0 0.0
    %868 = vmatmul.mubr.f32.gmra.mrb[0].mxu0 %v801
    %v869 = vpop.f32.mrb[0].mxu0
    %v870 = vadd.f32 %v798, %v869
    %v871 = vpop.f32.mrb[0].mxu0
    %872 = vdwg.mxu0
    %v873 = vadd.f32 %v870, %v716
    %v874 = vsel %vm63, %v873, 0.0
    %875 = vadd.xlane.f32.xlu0 %v874
    %v876 = vpop.xlane.xlu0 %875
    %v877 = vmul.f32 %v876, %v696
    %v878 = vsub.f32 %v873, %v877
    %v879 = vmul.f32 %v878, %v878
    %v880 = vsel %vm63, %v879, 0.0
    %881 = vadd.xlane.f32.xlu0 %v880
    %v882 = vpop.xlane.xlu0 %881
    %v883 = vmul.f32 %v882, %v696
    %v884 = vadd.f32 %v883, 1e-05
    %v885 = vrsqrt.pop %v884
    %v886 = vmul.f32 %v878, %v885
    %v887 = vlaneseq
    %v888 = vshrl.u32 %v887, 7
    %v889 = vsub.s32 0, %v888
    %v890 = vrot.slane %v59, %v889
    %v891 = vmul.f32 %v886, %v890
    %v892 = vlaneseq
    %v893 = vshrl.u32 %v892, 7
    %v894 = vsub.s32 0, %v893
    %v895 = vrot.slane %v60, %v894
    %v896 = vadd.f32 %v891, %v895
    %897 = vst [vmem:[%s2] sm:$0xff] 0.0
    %898 = vst [vmem:[%s2 + $0x8] sm:$0xff] 0.0
    %899 = vst.msk [vmem:[%s2] sm:$0xff] %vm63, %v896
    %900 = vst.msk [vmem:[%s2 + $0x8] sm:$0xff] %vm63, %v689
    // Predicated region
    $region14: #{_forward.1} parent=1 // pred_check
      _
    $region15: #{_forward.1} parent=1 // pred_check_branch
      %902 = sbr.rel (0) target = $region17
    $region16: #{_forward.1} parent=1 // pred_region
      _
    $region17: #{_forward.1} parent=1 // pred_fallthru
      _
    // Predicated region
    $region18: #{_forward.1} parent=1 // pred_check
      _
    $region19: #{_forward.1} parent=1 // pred_check_branch
      %904 = sbr.rel (0) target = $region21
    $region20: #{_forward.1} parent=1 // pred_region
      _
    $region21: #{_forward.1} parent=1 // pred_fallthru
      _
    %905 = vsyncpa [#allocation3], 1

</llo_original>
